<compile_context>
chip_gen: v7x
topology: tpu7x:2x2x1
jax: 0.10.0
libtpu: 0.0.40
codegen_flags: <defaults>
</compile_context>

<pallas_src>
import jax
import jax.numpy as jnp
from jax import lax
from jax.experimental import pallas as pl
from jax.experimental.pallas import tpu as pltpu


def _encode_kernel(units_ref, f0v_ref, spkmix_ref, wu_ref, smap_ref, wfv_ref, o_ref):
    # units_ref : (tile_t, U)      gathered hubert units          (compute dtype)
    # f0v_ref   : (2, tile_t)      rows = [raw f0, volume]        (f32)
    # spkmix_ref: (tile_t, n_spk)  per-frame speaker mixture      (compute dtype)
    # wu_ref    : (H, U)           unit_embed.weight (out, in)    (compute dtype)
    # smap_ref  : (H, n_spk)       speaker_map, transposed        (compute dtype)
    # wfv_ref   : (H, 3)           [f0_embed.w, volume_embed.w, unit_b+f0_b+vol_b]
    # o_ref     : (H, tile_t)      output tile in channel-first (B, H, T) layout

    # unit_embed: (H, U) x (tile_t, U)^T -> (H, tile_t) on the MXU, f32 accumulate.
    acc = lax.dot_general(
        wu_ref[...], units_ref[...],
        dimension_numbers=(((1,), (1,)), ((), ())),
        preferred_element_type=jnp.float32)

    # per-frame speaker term: (H, n_spk) x (tile_t, n_spk)^T -> (H, tile_t).
    acc = acc + lax.dot_general(
        smap_ref[...], spkmix_ref[...],
        dimension_numbers=(((1,), (1,)), ((), ())),
        preferred_element_type=jnp.float32)

    # f0 / volume embeddings as VPU broadcast-MACs; log on the EUP.
    f0v = f0v_ref[...]                                          # (2, tile_t) f32
    f0_feat = jnp.log(1.0 + f0v[0:1, :] * (1.0 / 700.0))        # (1, tile_t)
    vol = f0v[1:2, :]                                           # (1, tile_t)
    wfv = wfv_ref[...]                                          # (H, 3)
    acc = acc + wfv[:, 0:1] * f0_feat + wfv[:, 1:2] * vol + wfv[:, 2:3]

    o_ref[...] = acc.astype(o_ref.dtype)


def unit2mel_v2_reflow_encode(units_g, f0, volume, spk_mix, speaker_map, params,
                              *, tile_t=256, compute_dtype=jnp.bfloat16):
    """units_g: (B,T,U) already gathered; f0, volume: (B,T); spk_mix: (T,n_spk);
    speaker_map: (n_spk,H); params in PyTorch nn.Linear layout (unit_w: (H,U)).
    Returns (x0, x_bht, f0) matching Unit2MelV2ReFlow.forward (naive_fn=None)."""
    B, T, U = units_g.shape
    H = params["unit_w"].shape[0]
    n_spk = speaker_map.shape[0]
    assert tile_t % 128 == 0, "tile_t is the output lane axis; keep it 128-dense"

    # --- pad T up to a tile multiple (padded tail computed then sliced off) ---
    t_tiles = pl.cdiv(T, tile_t)
    T_pad = t_tiles * tile_t
    pad_t = T_pad - T
    if pad_t:
        units_g = jnp.pad(units_g, ((0, 0), (0, pad_t), (0, 0)))
        f0_p = jnp.pad(f0, ((0, 0), (0, pad_t)))
        vol_p = jnp.pad(volume, ((0, 0), (0, pad_t)))
        spk_mix_p = jnp.pad(spk_mix, ((0, pad_t), (0, 0)))
    else:
        f0_p, vol_p, spk_mix_p = f0, volume, spk_mix

    # --- operand packing (weights stay tiny / resident in VMEM) ---
    units_c = units_g.astype(compute_dtype)                         # (B, T_pad, U)
    spkmix_c = spk_mix_p.astype(compute_dtype)                      # (T_pad, n_spk)
    wu = params["unit_w"].astype(compute_dtype)                     # (H, U)
    smap_t = jnp.transpose(speaker_map).astype(compute_dtype)       # (H, n_spk)
    f0v = jnp.stack([f0_p, vol_p], axis=1).astype(jnp.float32)      # (B, 2, T_pad)
    bias = params["unit_b"] + params["f0_b"] + params["vol_b"]
    wfv = jnp.stack([params["f0_w"], params["vol_w"], bias],
                    axis=1).astype(jnp.float32)                     # (H, 3)

    # --- VMEM budget (explicit so the same tiling stays portable to v7x 64 MiB) ---
    itemsize = jnp.dtype(compute_dtype).itemsize
    block_bytes = (
        2 * tile_t * U * itemsize        # units tile, double-buffered
        + 2 * 2 * tile_t * 4             # [f0, volume] tile
        + 2 * tile_t * n_spk * itemsize  # spk_mix tile
        + 2 * H * U * itemsize           # unit_embed weight (resident)
        + 2 * H * n_spk * itemsize       # speaker_map
        + 2 * H * 3 * 4                  # f0/vol weights + combined bias
        + 2 * H * tile_t * 4             # output tile, double-buffered
        + 2 * H * tile_t * 4             # f32 accumulator working-set headroom
    )
    vmem_limit = int(min(48 * 2**20, max(32 * 2**20, 2 * block_bytes)))

    grid = (t_tiles, B)  # long (frame) axis leading -> megacore shards it on v7x
    x_pad = pl.pallas_call(
        _encode_kernel,
        out_shape=jax.ShapeDtypeStruct((B, H, T_pad), jnp.float32),
        grid_spec=pltpu.PrefetchScalarGridSpec(
            num_scalar_prefetch=0,
            grid=grid,
            in_specs=[
                pl.BlockSpec((None, tile_t, U), lambda t, b: (b, t, 0)),  # units
                pl.BlockSpec((None, 2, tile_t), lambda t, b: (b, 0, t)),  # [f0, vol]
                pl.BlockSpec((tile_t, n_spk),   lambda t, b: (t, 0)),     # spk_mix
                pl.BlockSpec((H, U),            lambda t, b: (0, 0)),     # unit weight
                pl.BlockSpec((H, n_spk),        lambda t, b: (0, 0)),     # speaker map
                pl.BlockSpec((H, 3),            lambda t, b: (0, 0)),     # f0/vol/bias
            ],
            out_specs=pl.BlockSpec((None, H, tile_t), lambda t, b: (b, 0, t)),
        ),
        compiler_params=pltpu.CompilerParams(
            dimension_semantics=("parallel", "parallel"),
            vmem_limit_bytes=vmem_limit),
    )(units_c, f0v, spkmix_c, wu, smap_t, wfv)

    x_bht = x_pad[:, :, :T] if pad_t else x_pad                     # (B, H, T)
    # combo_trained_model == False (naive_fn=None) branch:
    return jnp.array([0.0], dtype=jnp.float32), x_bht, f0


def gather_units(units, mel2ph):
    """decoder_inp = F.pad(units, [0,0,1,0]); torch.gather along the frame dim."""
    B, T, U = units.shape
    decoder_inp = jnp.pad(units, ((0, 0), (1, 0), (0, 0)))
    idx = jnp.broadcast_to(mel2ph[:, :, None], (B, mel2ph.shape[1], U))
    return jnp.take_along_axis(decoder_inp, idx, axis=1)


def _reference(units_g, f0, volume, spk_mix, speaker_map, params):
    f0_feat = jnp.log(1.0 + f0 / 700.0)[..., None]
    x = (units_g @ params["unit_w"].T + params["unit_b"]
         + f0_feat * params["f0_w"] + params["f0_b"]
         + volume[..., None] * params["vol_w"] + params["vol_b"])
    x = x + (spk_mix @ speaker_map)[None]
    return jnp.transpose(x, (0, 2, 1))


if __name__ == "__main__":
    # Small shapes consistent with the module (B x n_frames x n_unit hubert features);
    # T=400 deliberately not a multiple of the 256-frame tile to exercise padding.
    B, T, U, H, n_spk = 2, 400, 32, 64, 4

    key = jax.random.PRNGKey(0)
    ks = jax.random.split(key, 12)

    units = jax.random.normal(ks[0], (B, T, U), dtype=jnp.float32)
    mel2ph = jax.random.randint(ks[1], (B, T), 0, T + 1)          # 0 -> padded zero frame
    f0 = jnp.abs(jax.random.normal(ks[2], (B, T), dtype=jnp.float32)) * 200.0 + 50.0
    volume = jax.random.uniform(ks[3], (B, T), dtype=jnp.float32)
    spk_mix = jax.random.uniform(ks[4], (T, n_spk), dtype=jnp.float32)
    spk_mix = spk_mix / jnp.sum(spk_mix, axis=-1, keepdims=True)

    # Synthetic parameters in PyTorch layout:
    #   unit_embed: Linear(U, H) -> weight (H, U); f0/volume_embed: Linear(1, H);
    #   spk_embed:  Embedding(n_spk, H) -> speaker_map (n_spk, H)
    params = {
        "unit_w": jax.random.normal(ks[5], (H, U), dtype=jnp.float32) * 0.05,
        "unit_b": jax.random.normal(ks[6], (H,), dtype=jnp.float32) * 0.05,
        "f0_w":   jax.random.normal(ks[7], (H,), dtype=jnp.float32) * 0.05,
        "f0_b":   jax.random.normal(ks[8], (H,), dtype=jnp.float32) * 0.05,
        "vol_w":  jax.random.normal(ks[9], (H,), dtype=jnp.float32) * 0.05,
        "vol_b":  jax.random.normal(ks[10], (H,), dtype=jnp.float32) * 0.05,
    }
    speaker_map = jax.random.normal(ks[11], (n_spk, H), dtype=jnp.float32) * 0.05

    units_g = gather_units(units, mel2ph)
    ref = _reference(units_g, f0, volume, spk_mix, speaker_map, params)

    # --- f32 compute path: tight numerical check ---
    x0, x_f32, f0_out = unit2mel_v2_reflow_encode(
        units_g, f0, volume, spk_mix, speaker_map, params,
        tile_t=256, compute_dtype=jnp.float32)
    jax.block_until_ready(x_f32)
    assert x0.shape == (1,)
    assert x_f32.shape == (B, H, T)
    assert f0_out.shape == (B, T)
    assert jnp.allclose(x_f32, ref, atol=1e-3, rtol=1e-3)

    # --- bf16 compute path (default / performance config): looser check ---
    _, x_bf16, _ = unit2mel_v2_reflow_encode(
        units_g, f0, volume, spk_mix, speaker_map, params,
        tile_t=256, compute_dtype=jnp.bfloat16)
    jax.block_until_ready(x_bf16)
    assert x_bf16.shape == (B, H, T)
    assert jnp.allclose(x_bf16, ref, atol=2e-2, rtol=2e-2)

    print("KERNEL_OK")
</pallas_src>

<mosaic_0001>
module attributes {stable_mosaic.version = 11 : i64} {
  func.func @_encode_kernel(%arg0: i32, %arg1: i32, %arg2: memref<1x256x32xf32, #tpu.memory_space<vmem>>, %arg3: memref<1x2x256xf32, #tpu.memory_space<vmem>>, %arg4: memref<256x4xf32, #tpu.memory_space<vmem>>, %arg5: memref<64x32xf32, #tpu.memory_space<vmem>>, %arg6: memref<64x4xf32, #tpu.memory_space<vmem>>, %arg7: memref<64x3xf32, #tpu.memory_space<vmem>>, %arg8: memref<1x64x256xf32, #tpu.memory_space<vmem>>) attributes {dimension_semantics = [#tpu.dimension_semantics<parallel>, #tpu.dimension_semantics<parallel>], iteration_bounds = array<i64: 2, 2>, scalar_prefetch = 0 : i64, scratch_operands = 0 : i64, tpu.core_type = #tpu.core_type<tc>, window_params = [{transform_indices = @transform_0, window_bounds = array<i64: 1, 256, 32>}, {transform_indices = @transform_1, window_bounds = array<i64: 1, 2, 256>}, {transform_indices = @transform_2, window_bounds = array<i64: 256, 4>}, {pipeline_mode = #tpu.pipeline_mode<synchronous>, transform_indices = @transform_3, window_bounds = array<i64: 64, 32>}, {pipeline_mode = #tpu.pipeline_mode<synchronous>, transform_indices = @transform_4, window_bounds = array<i64: 64, 4>}, {pipeline_mode = #tpu.pipeline_mode<synchronous>, transform_indices = @transform_5, window_bounds = array<i64: 64, 3>}, {transform_indices = @transform_6, window_bounds = array<i64: 1, 64, 256>}]} {
    %c0 = arith.constant 0 : index
    %c0_0 = arith.constant 0 : index
    %0 = vector.load %arg5[%c0, %c0_0] : memref<64x32xf32, #tpu.memory_space<vmem>>, vector<64x32xf32>
    %c0_1 = arith.constant 0 : index
    %c0_2 = arith.constant 0 : index
    %c0_3 = arith.constant 0 : index
    %1 = vector.load %arg2[%c0_1, %c0_2, %c0_3] : memref<1x256x32xf32, #tpu.memory_space<vmem>>, vector<1x256x32xf32>
    %2 = vector.shape_cast %1 : vector<1x256x32xf32> to vector<256x32xf32>
    %cst = arith.constant dense<0.000000e+00> : vector<64x256xf32>
    %3 = tpu.matmul %0, %2, %cst {dimension_numbers = #tpu.dot_dimension_numbers<[1], [1], [0], [0], [0, 0, 1, 0], [], []>} : vector<64x32xf32>, vector<256x32xf32>, vector<64x256xf32> -> vector<64x256xf32>
    %c0_4 = arith.constant 0 : index
    %c0_5 = arith.constant 0 : index
    %4 = vector.load %arg6[%c0_4, %c0_5] : memref<64x4xf32, #tpu.memory_space<vmem>>, vector<64x4xf32>
    %c0_6 = arith.constant 0 : index
    %c0_7 = arith.constant 0 : index
    %5 = vector.load %arg4[%c0_6, %c0_7] : memref<256x4xf32, #tpu.memory_space<vmem>>, vector<256x4xf32>
    %cst_8 = arith.constant dense<0.000000e+00> : vector<64x256xf32>
    %6 = tpu.matmul %4, %5, %cst_8 {dimension_numbers = #tpu.dot_dimension_numbers<[1], [1], [0], [0], [0, 0, 1, 0], [], []>} : vector<64x4xf32>, vector<256x4xf32>, vector<64x256xf32> -> vector<64x256xf32>
    %7 = arith.addf %3, %6 : vector<64x256xf32>
    %c0_9 = arith.constant 0 : index
    %c0_10 = arith.constant 0 : index
    %c0_11 = arith.constant 0 : index
    %8 = vector.load %arg3[%c0_9, %c0_10, %c0_11] : memref<1x2x256xf32, #tpu.memory_space<vmem>>, vector<1x2x256xf32>
    %9 = vector.shape_cast %8 : vector<1x2x256xf32> to vector<2x256xf32>
    %10 = vector.extract_strided_slice %9 {offsets = [0, 0], sizes = [1, 256], strides = [1, 1]} : vector<2x256xf32> to vector<1x256xf32>
    %cst_12 = arith.constant 0.00142857141 : f32
    %11 = vector.broadcast %cst_12 : f32 to vector<1x256xf32>
    %12 = arith.mulf %10, %11 : vector<1x256xf32>
    %cst_13 = arith.constant 1.000000e+00 : f32
    %13 = vector.broadcast %cst_13 : f32 to vector<1x256xf32>
    %14 = arith.addf %13, %12 : vector<1x256xf32>
    %15 = math.log %14 : vector<1x256xf32>
    %16 = vector.extract_strided_slice %9 {offsets = [1, 0], sizes = [1, 256], strides = [1, 1]} : vector<2x256xf32> to vector<1x256xf32>
    %c0_14 = arith.constant 0 : index
    %c0_15 = arith.constant 0 : index
    %17 = vector.load %arg7[%c0_14, %c0_15] : memref<64x3xf32, #tpu.memory_space<vmem>>, vector<64x3xf32>
    %18 = vector.extract_strided_slice %17 {offsets = [0, 0], sizes = [64, 1], strides = [1, 1]} : vector<64x3xf32> to vector<64x1xf32>
    %19 = vector.broadcast %18 : vector<64x1xf32> to vector<64x256xf32>
    %20 = vector.broadcast %15 : vector<1x256xf32> to vector<64x256xf32>
    %21 = arith.mulf %19, %20 : vector<64x256xf32>
    %22 = arith.addf %7, %21 : vector<64x256xf32>
    %23 = vector.extract_strided_slice %17 {offsets = [0, 1], sizes = [64, 1], strides = [1, 1]} : vector<64x3xf32> to vector<64x1xf32>
    %24 = vector.broadcast %23 : vector<64x1xf32> to vector<64x256xf32>
    %25 = vector.broadcast %16 : vector<1x256xf32> to vector<64x256xf32>
    %26 = arith.mulf %24, %25 : vector<64x256xf32>
    %27 = arith.addf %22, %26 : vector<64x256xf32>
    %28 = vector.extract_strided_slice %17 {offsets = [0, 2], sizes = [64, 1], strides = [1, 1]} : vector<64x3xf32> to vector<64x1xf32>
    %29 = vector.broadcast %28 : vector<64x1xf32> to vector<64x256xf32>
    %30 = arith.addf %27, %29 : vector<64x256xf32>
    %c0_16 = arith.constant 0 : index
    %c0_17 = arith.constant 0 : index
    %c0_18 = arith.constant 0 : index
    %31 = vector.load %arg8[%c0_16, %c0_17, %c0_18] : memref<1x64x256xf32, #tpu.memory_space<vmem>>, vector<1x64x256xf32>
    %32 = vector.shape_cast %31 : vector<1x64x256xf32> to vector<64x256xf32>
    %33 = vector.shape_cast %30 : vector<64x256xf32> to vector<1x64x256xf32>
    tpu.vector_store %arg8[%c0_16, %c0_17, %c0_18], %33 {strides = array<i32>} : memref<1x64x256xf32, #tpu.memory_space<vmem>>, vector<1x64x256xf32>,
    return
  }
  func.func @transform_0(%arg0: i32, %arg1: i32) -> (i32, i32, i32) {
    %c0_i32 = arith.constant 0 : i32
    %c0_i32_0 = arith.constant 0 : i32
    return %arg1, %arg0, %c0_i32 : i32, i32, i32
  }
  func.func @transform_1(%arg0: i32, %arg1: i32) -> (i32, i32, i32) {
    %c0_i32 = arith.constant 0 : i32
    %c0_i32_0 = arith.constant 0 : i32
    return %arg1, %c0_i32, %arg0 : i32, i32, i32
  }
  func.func @transform_2(%arg0: i32, %arg1: i32) -> (i32, i32) {
    %c0_i32 = arith.constant 0 : i32
    %c0_i32_0 = arith.constant 0 : i32
    return %arg0, %c0_i32 : i32, i32
  }
  func.func @transform_3(%arg0: i32, %arg1: i32) -> (i32, i32) {
    %c0_i32 = arith.constant 0 : i32
    %c0_i32_0 = arith.constant 0 : i32
    %c0_i32_1 = arith.constant 0 : i32
    return %c0_i32, %c0_i32_0 : i32, i32
  }
  func.func @transform_4(%arg0: i32, %arg1: i32) -> (i32, i32) {
    %c0_i32 = arith.constant 0 : i32
    %c0_i32_0 = arith.constant 0 : i32
    %c0_i32_1 = arith.constant 0 : i32
    return %c0_i32, %c0_i32_0 : i32, i32
  }
  func.func @transform_5(%arg0: i32, %arg1: i32) -> (i32, i32) {
    %c0_i32 = arith.constant 0 : i32
    %c0_i32_0 = arith.constant 0 : i32
    %c0_i32_1 = arith.constant 0 : i32
    return %c0_i32, %c0_i32_0 : i32, i32
  }
  func.func @transform_6(%arg0: i32, %arg1: i32) -> (i32, i32, i32) {
    %c0_i32 = arith.constant 0 : i32
    %c0_i32_0 = arith.constant 0 : i32
    return %arg1, %c0_i32, %arg0 : i32, i32, i32
  }
}

</mosaic_0001>

<llo_original>
// kernel: tpu_custom_call.1
$region0: #{tpu_custom_call.1}
  #allocation0 [shape = 'u32[]', space=smem, size = 0x4, offset = 0x4, fixed_abs, tag = 'smem constant byte address 0x4 - core index']
  #allocation1 [shape = 'u32[144,128]{1,0:T(1,128)}', space=vmem, size = 0x12000, scoped, tag = 'internal scratch']
  %s0 = inlined_call_operand.vmem [shape: f32[2,512,32], index: 0, kind: input, shape index: {}]
  %s1 = inlined_call_operand.vmem [shape: f32[2,2,512], index: 1, kind: input, shape index: {}]
  %s2 = inlined_call_operand.vmem [shape: f32[512,4], index: 2, kind: input, shape index: {}]
  %s3 = inlined_call_operand.vmem [shape: f32[64,32], index: 3, kind: input, shape index: {}]
  %s4 = inlined_call_operand.vmem [shape: f32[64,4], index: 4, kind: input, shape index: {}]
  %s5 = inlined_call_operand.vmem [shape: f32[64,3], index: 5, kind: input, shape index: {}]
  %s6 = inlined_call_operand.hbm [shape: f32[2,64,512], index: 6, kind: output, shape index: {}]
  %s7 = sld [smem:[#allocation0]]
  $region57: #{tpu_custom_call.1} parent=0
    _
  %s9 = ssub.s32 1, %s7
  %s10 = scalar_select 0, %s9, %s7
  $region1: #{tpu_custom_call.1} parent=0
    #allocation2 [shape = 'u8[131072]{0}', space=vmem, size = 0x20000, scoped, tag = 'output window, operand 0']
    #allocation3 [shape = 's32[2]{0}', space=sflag, size = 0x8, scoped, tag = 'scoped memory for tpu_custom_call.1']
    %11 = vsyncpa [#allocation3], 0
    %s12 = scalar_lea.sflag [#allocation3], 1
    %13 = vsyncpa %s12, 0
    loop: start=0, step=1, limit=6
    $region2: #{tpu_custom_call.1} parent=1 // loop_pre_header
      _
    $region3: #{tpu_custom_call.1} parent=1 // loop_header
      %s15 = sphi 0, %s19
      %p16 = scmp.ge.s32.totalorder %s15, 6
      %s22 = sphi 0, %s34
      %s23 = sphi 0, %s30
      %s24 = sphi 0, %s22
      %s25 = sphi 0, %s23
      %s26 = sphi 0, %s24
      %s27 = sphi 0, %s25
      %s39 = sphi 0, %s41
      %s42 = sphi 0, %s39
      %s43 = sphi 0, %s42
      %s59 = sphi 0, %s43
      %s67 = sphi 0, %s69
      %s70 = sphi 0, %s67
      %s71 = sphi 0, %s70
      %s87 = sphi 0, %s71
      %s93 = sphi 0, %s95
      %s96 = sphi 0, %s93
      %s97 = sphi 0, %s96
      %s113 = sphi 0, %s97
      %s117 = sphi 0, %s117
      %s119 = sphi 0, %s117
      %s120 = sphi 0, %s119
      %s134 = sphi 0, %s120
      %s138 = sphi 0, %s138
      %s140 = sphi 0, %s138
      %s141 = sphi 0, %s140
      %s155 = sphi 0, %s141
      %s159 = sphi 0, %s159
      %s161 = sphi 0, %s159
      %s162 = sphi 0, %s161
      %s176 = sphi 0, %s162
      %s184 = sphi 0, %s186
      %s187 = sphi 0, %s184
      %s188 = sphi 0, %s187
      %s204 = sphi 0, %s188
    $region4: #{tpu_custom_call.1} parent=1 // loop_header_branch
      %18 = sbr.rel (%p16) target = $region8
    $region5: #{tpu_custom_call.1} parent=1 // loop_body
      %s20 = ssub.s32 %s15, 1
      %s21 = ssub.s32 %s15, 2
      %s28 = sadd.s32 1, %s23
      %p29 = scmp.ge.s32.totalorder %s28, 2
      %s30 = scalar_select %p29, 0, %s28
      %s31 = sadd.s32 1, %s22
      %s32 = scalar_select %p29, %s31, %s22
      %p33 = scmp.ge.s32.totalorder %s32, 2
      %s34 = scalar_select %p33, 0, %s32
      %s35 = ssub.s32 %s23, %s30
      %s36 = ssub.s32 %s22, %s34
      %s37 = sor.u32 %s35, %s36
      %p38 = scmp.eq.s32.totalorder %s37, 0
      %s40 = sadd.s32 %s39, 1
      %s41 = scalar_select %p38, %s39, %s40
      %p44 = pneg %p38
      %p45 = scmp.eq.s32.totalorder %s15, 3
      %p46 = por %p44, %p45
      %p47 = scmp.ne.s32.totalorder %s39, %s42
      %p48 = scmp.eq.s32.totalorder %s15, 0
      %p49 = por %p47, %p48
      %p50 = scmp.ne.s32.totalorder %s39, %s42
      %p51 = scmp.eq.s32.totalorder %s20, 3
      %p52 = por %p50, %p51
      %p53 = scmp.ne.s32.totalorder %s42, %s43
      %p54 = scmp.eq.s32.totalorder %s20, 0
      %p55 = por %p53, %p54
      %p56 = scmp.ne.s32.totalorder %s42, %s43
      %p57 = scmp.eq.s32.totalorder %s21, 3
      %p58 = por %p56, %p57
      %p60 = scmp.ne.s32.totalorder %s43, %s59
      %p61 = scmp.eq.s32.totalorder %s21, 0
      %p62 = por %p60, %p61
      %s63 = ssub.s32 %s23, %s30
      %s64 = ssub.s32 %s22, %s34
      %s65 = sor.u32 %s63, %s64
      %p66 = scmp.eq.s32.totalorder %s65, 0
      %s68 = sadd.s32 %s67, 1
      %s69 = scalar_select %p66, %s67, %s68
      %p72 = pneg %p66
      %p73 = scmp.eq.s32.totalorder %s15, 3
      %p74 = por %p72, %p73
      %p75 = scmp.ne.s32.totalorder %s67, %s70
      %p76 = scmp.eq.s32.totalorder %s15, 0
      %p77 = por %p75, %p76
      %p78 = scmp.ne.s32.totalorder %s67, %s70
      %p79 = scmp.eq.s32.totalorder %s20, 3
      %p80 = por %p78, %p79
      %p81 = scmp.ne.s32.totalorder %s70, %s71
      %p82 = scmp.eq.s32.totalorder %s20, 0
      %p83 = por %p81, %p82
      %p84 = scmp.ne.s32.totalorder %s70, %s71
      %p85 = scmp.eq.s32.totalorder %s21, 3
      %p86 = por %p84, %p85
      %p88 = scmp.ne.s32.totalorder %s71, %s87
      %p89 = scmp.eq.s32.totalorder %s21, 0
      %p90 = por %p88, %p89
      %s91 = ssub.s32 %s22, %s34
      %p92 = scmp.eq.s32.totalorder %s91, 0
      %s94 = sadd.s32 %s93, 1
      %s95 = scalar_select %p92, %s93, %s94
      %p98 = pneg %p92
      %p99 = scmp.eq.s32.totalorder %s15, 3
      %p100 = por %p98, %p99
      %p101 = scmp.ne.s32.totalorder %s93, %s96
      %p102 = scmp.eq.s32.totalorder %s15, 0
      %p103 = por %p101, %p102
      %p104 = scmp.ne.s32.totalorder %s93, %s96
      %p105 = scmp.eq.s32.totalorder %s20, 3
      %p106 = por %p104, %p105
      %p107 = scmp.ne.s32.totalorder %s96, %s97
      %p108 = scmp.eq.s32.totalorder %s20, 0
      %p109 = por %p107, %p108
      %p110 = scmp.ne.s32.totalorder %s96, %s97
      %p111 = scmp.eq.s32.totalorder %s21, 3
      %p112 = por %p110, %p111
      %p114 = scmp.ne.s32.totalorder %s97, %s113
      %p115 = scmp.eq.s32.totalorder %s21, 0
      %p116 = por %p114, %p115
      %s118 = sadd.s32 %s117, 1
      %p121 = scmp.eq.s32.totalorder %s15, 3
      %p122 = scmp.ne.s32.totalorder %s117, %s119
      %p123 = scmp.eq.s32.totalorder %s15, 0
      %p124 = por %p122, %p123
      %p125 = scmp.ne.s32.totalorder %s117, %s119
      %p126 = scmp.eq.s32.totalorder %s20, 3
      %p127 = por %p125, %p126
      %p128 = scmp.ne.s32.totalorder %s119, %s120
      %p129 = scmp.eq.s32.totalorder %s20, 0
      %p130 = por %p128, %p129
      %p131 = scmp.ne.s32.totalorder %s119, %s120
      %p132 = scmp.eq.s32.totalorder %s21, 3
      %p133 = por %p131, %p132
      %p135 = scmp.ne.s32.totalorder %s120, %s134
      %p136 = scmp.eq.s32.totalorder %s21, 0
      %p137 = por %p135, %p136
      %s139 = sadd.s32 %s138, 1
      %p142 = scmp.eq.s32.totalorder %s15, 3
      %p143 = scmp.ne.s32.totalorder %s138, %s140
      %p144 = scmp.eq.s32.totalorder %s15, 0
      %p145 = por %p143, %p144
      %p146 = scmp.ne.s32.totalorder %s138, %s140
      %p147 = scmp.eq.s32.totalorder %s20, 3
      %p148 = por %p146, %p147
      %p149 = scmp.ne.s32.totalorder %s140, %s141
      %p150 = scmp.eq.s32.totalorder %s20, 0
      %p151 = por %p149, %p150
      %p152 = scmp.ne.s32.totalorder %s140, %s141
      %p153 = scmp.eq.s32.totalorder %s21, 3
      %p154 = por %p152, %p153
      %p156 = scmp.ne.s32.totalorder %s141, %s155
      %p157 = scmp.eq.s32.totalorder %s21, 0
      %p158 = por %p156, %p157
      %s160 = sadd.s32 %s159, 1
      %p163 = scmp.eq.s32.totalorder %s15, 3
      %p164 = scmp.ne.s32.totalorder %s159, %s161
      %p165 = scmp.eq.s32.totalorder %s15, 0
      %p166 = por %p164, %p165
      %p167 = scmp.ne.s32.totalorder %s159, %s161
      %p168 = scmp.eq.s32.totalorder %s20, 3
      %p169 = por %p167, %p168
      %p170 = scmp.ne.s32.totalorder %s161, %s162
      %p171 = scmp.eq.s32.totalorder %s20, 0
      %p172 = por %p170, %p171
      %p173 = scmp.ne.s32.totalorder %s161, %s162
      %p174 = scmp.eq.s32.totalorder %s21, 3
      %p175 = por %p173, %p174
      %p177 = scmp.ne.s32.totalorder %s162, %s176
      %p178 = scmp.eq.s32.totalorder %s21, 0
      %p179 = por %p177, %p178
      %s180 = ssub.s32 %s23, %s30
      %s181 = ssub.s32 %s22, %s34
      %s182 = sor.u32 %s180, %s181
      %p183 = scmp.eq.s32.totalorder %s182, 0
      %s185 = sadd.s32 %s184, 1
      %s186 = scalar_select %p183, %s184, %s185
      %p189 = pneg %p183
      %p190 = scmp.eq.s32.totalorder %s15, 3
      %p191 = por %p189, %p190
      %p192 = scmp.ne.s32.totalorder %s184, %s187
      %p193 = scmp.eq.s32.totalorder %s15, 0
      %p194 = por %p192, %p193
      %p195 = scmp.ne.s32.totalorder %s184, %s187
      %p196 = scmp.eq.s32.totalorder %s20, 3
      %p197 = por %p195, %p196
      %p198 = scmp.ne.s32.totalorder %s187, %s188
      %p199 = scmp.eq.s32.totalorder %s20, 0
      %p200 = por %p198, %p199
      %p201 = scmp.ne.s32.totalorder %s187, %s188
      %p202 = scmp.eq.s32.totalorder %s21, 3
      %p203 = por %p201, %p202
      %p205 = scmp.ne.s32.totalorder %s188, %s204
      %p206 = scmp.eq.s32.totalorder %s21, 0
      %p207 = por %p205, %p206
      %p208 = scmp.le.s32.totalorder 1, %s15
      %p209 = scmp.lt.s32.totalorder %s15, 5
      %p210 = pnand %p208, %p209
      %p211 = pneg %p210
      // Predicated region
      $region9: #{tpu_custom_call.1} parent=5 // pred_check
        _
      $region10: #{tpu_custom_call.1} parent=5 // pred_check_branch
        %213 = sbr.rel (%p210) target = $region12
      $region11: #{tpu_custom_call.1} parent=5 // pred_region
        %s214 = ssub.s32 %s15, 1
        // Predicated region
        $region13: #{tpu_custom_call.1} parent=11 // pred_check
          %p215 = pneg %p130
        $region14: #{tpu_custom_call.1} parent=11 // pred_check_branch
          %217 = sbr.rel (%p215) target = $region16
        $region15: #{tpu_custom_call.1} parent=11 // pred_region
          _
        $region16: #{tpu_custom_call.1} parent=11 // pred_fallthru
          _
        // Predicated region
        $region17: #{tpu_custom_call.1} parent=11 // pred_check
          %p218 = pneg %p151
        $region18: #{tpu_custom_call.1} parent=11 // pred_check_branch
          %220 = sbr.rel (%p218) target = $region20
        $region19: #{tpu_custom_call.1} parent=11 // pred_region
          _
        $region20: #{tpu_custom_call.1} parent=11 // pred_fallthru
          _
        // Predicated region
        $region21: #{tpu_custom_call.1} parent=11 // pred_check
          %p221 = pneg %p172
        $region22: #{tpu_custom_call.1} parent=11 // pred_check_branch
          %223 = sbr.rel (%p221) target = $region24
        $region23: #{tpu_custom_call.1} parent=11 // pred_region
          _
        $region24: #{tpu_custom_call.1} parent=11 // pred_fallthru
          _
      $region12: #{tpu_custom_call.1} parent=5 // pred_fallthru
        _
      %p224 = scmp.lt.s32.totalorder %s15, 4
      // Predicated region
      $region25: #{tpu_custom_call.1} parent=5 // pred_check
        %p225 = pneg %p224
      $region26: #{tpu_custom_call.1} parent=5 // pred_check_branch
        %227 = sbr.rel (%p225) target = $region28
      $region27: #{tpu_custom_call.1} parent=5 // pred_region
        // Predicated region
        $region29: #{tpu_custom_call.1} parent=27 // pred_check
          %p228 = pneg %p49
        $region30: #{tpu_custom_call.1} parent=27 // pred_check_branch
          %230 = sbr.rel (%p228) target = $region32
        $region31: #{tpu_custom_call.1} parent=27 // pred_region
          %s231 = smul.u32 32, %s22
          %p232 = scmp.lt.s32.totalorder %s23, 1
          %s233 = scalar_select %p232, %s23, 1
          %p234 = scmp.lt.s32.totalorder %s231, 63
          %s235 = scalar_select %p234, %s231, 63
          %s236 = smul.addr %s233, 64
          %s237 = sadd.s32 %s235, %s236
          %s238 = smul.addr %s237, 8
          %s239 = scalar_lea.vmem %s0, %s238
          %s240 = smul.u32 32, %s22
        $region32: #{tpu_custom_call.1} parent=27 // pred_fallthru
          _
        // Predicated region
        $region33: #{tpu_custom_call.1} parent=27 // pred_check
          %p241 = pneg %p77
        $region34: #{tpu_custom_call.1} parent=27 // pred_check_branch
          %243 = sbr.rel (%p241) target = $region36
        $region35: #{tpu_custom_call.1} parent=27 // pred_region
          %s244 = smul.u32 2, %s22
          %p245 = scmp.lt.s32.totalorder %s23, 1
          %s246 = scalar_select %p245, %s23, 1
          %p247 = scmp.lt.s32.totalorder %s244, 3
          %s248 = scalar_select %p247, %s244, 3
          %s249 = smul.addr %s246, 4
          %s250 = sadd.s32 %s248, %s249
          %s251 = smul.addr %s250, 2
          %s252 = scalar_lea.vmem %s1, %s251
          %s253 = smul.u32 2, %s22
        $region36: #{tpu_custom_call.1} parent=27 // pred_fallthru
          _
        // Predicated region
        $region37: #{tpu_custom_call.1} parent=27 // pred_check
          %p254 = pneg %p103
        $region38: #{tpu_custom_call.1} parent=27 // pred_check_branch
          %256 = sbr.rel (%p254) target = $region40
        $region39: #{tpu_custom_call.1} parent=27 // pred_region
          %s257 = smul.u32 32, %s22
          %p258 = scmp.lt.s32.totalorder %s257, 63
          %s259 = scalar_select %p258, %s257, 63
          %s260 = smul.addr %s259, 8
          %s261 = scalar_lea.vmem %s2, %s260
          %s262 = smul.u32 32, %s22
        $region40: #{tpu_custom_call.1} parent=27 // pred_fallthru
          _
      $region28: #{tpu_custom_call.1} parent=5 // pred_fallthru
        _
      %p263 = scmp.le.s32.totalorder 1, %s15
      %p264 = scmp.lt.s32.totalorder %s15, 5
      %p265 = pnand %p263, %p264
      %p266 = pneg %p265
      // Predicated region
      $region41: #{tpu_custom_call.1} parent=5 // pred_check
        _
      $region42: #{tpu_custom_call.1} parent=5 // pred_check_branch
        %268 = sbr.rel (%p265) target = $region44
      $region43: #{tpu_custom_call.1} parent=5 // pred_region
        %s269 = ssub.s32 %s15, 1
        %s270 = smul.u32 32, %s24
        %p271 = scmp.lt.s32.totalorder %s25, 1
        %s272 = scalar_select %p271, %s25, 1
        %p273 = scmp.lt.s32.totalorder %s270, 63
        %s274 = scalar_select %p273, %s270, 63
        %s275 = smul.addr %s272, 64
        %s276 = sadd.s32 %s274, %s275
        %s277 = smul.addr %s276, 8
        %s278 = scalar_lea.vmem %s0, %s277
        %p279 = pneg %p55
        %p280 = pneg %p52
        %s281 = smul.u32 2, %s24
        %p282 = scmp.lt.s32.totalorder %s25, 1
        %s283 = scalar_select %p282, %s25, 1
        %p284 = scmp.lt.s32.totalorder %s281, 3
        %s285 = scalar_select %p284, %s281, 3
        %s286 = smul.addr %s283, 4
        %s287 = sadd.s32 %s285, %s286
        %s288 = smul.addr %s287, 2
        %s289 = scalar_lea.vmem %s1, %s288
        %p290 = pneg %p83
        %p291 = pneg %p80
        %s292 = smul.u32 32, %s24
        %p293 = scmp.lt.s32.totalorder %s292, 63
        %s294 = scalar_select %p293, %s292, 63
        %s295 = smul.addr %s294, 8
        %s296 = scalar_lea.vmem %s2, %s295
        %p297 = pneg %p109
        %p298 = pneg %p106
        %p299 = pneg %p130
        %p300 = pneg %p127
        %p301 = pneg %p151
        %p302 = pneg %p148
        %p303 = pneg %p172
        %p304 = pneg %p169
        %p305 = pneg %p200
        %p306 = pneg %p197
        %s307 = sand.u32 %s187, 1
        %s308 = scalar_lea.sflag [#allocation3], %s307
        %s309 = sand.u32 %s187, 1
        %s310 = smul.addr %s309, 128
        %s311 = scalar_lea.vmem [#allocation2], %s310
        %s312 = smul.u32 32, %s24
        %p313 = scmp.lt.s32.totalorder %s25, 1
        %s314 = scalar_select %p313, %s25, 1
        %p315 = scmp.lt.s32.totalorder %s312, 63
        %s316 = scalar_select %p315, %s312, 63
        %s317 = smul.addr %s314, 64
        %s318 = sadd.s32 %s316, %s317
        %s319 = smul.addr %s318, 8
        %s320 = scalar_lea.vmem %s0, %s319
        %s321 = smul.u32 32, %s24
        %s322 = smul.u32 2, %s24
        %p323 = scmp.lt.s32.totalorder %s25, 1
        %s324 = scalar_select %p323, %s25, 1
        %p325 = scmp.lt.s32.totalorder %s322, 3
        %s326 = scalar_select %p325, %s322, 3
        %s327 = smul.addr %s324, 4
        %s328 = sadd.s32 %s326, %s327
        %s329 = smul.addr %s328, 2
        %s330 = scalar_lea.vmem %s1, %s329
        %s331 = smul.u32 2, %s24
        %s332 = smul.u32 32, %s24
        %p333 = scmp.lt.s32.totalorder %s332, 63
        %s334 = scalar_select %p333, %s332, 63
        %s335 = smul.addr %s334, 8
        %s336 = scalar_lea.vmem %s2, %s335
        %s337 = smul.u32 32, %s24
        %s338 = smul.u32 2, %s24
        %v339 = vld [vmem:[%s3] sm:$0xff]
        %v340 = vld [vmem:[%s3 + $0x8] sm:$0xff]
        %v341 = vld [vmem:[%s3 + $0x10] sm:$0xff]
        %v342 = vld [vmem:[%s3 + $0x18] sm:$0xff]
        %v343 = vld [vmem:[%s3 + $0x20] sm:$0xff]
        %v344 = vld [vmem:[%s3 + $0x28] sm:$0xff]
        %v345 = vld [vmem:[%s3 + $0x30] sm:$0xff]
        %v346 = vld [vmem:[%s3 + $0x38] sm:$0xff]
        %v347 = vld [vmem:[%s320] sm:$0xff]
        %v348 = vld [vmem:[%s320 + $0x8] sm:$0xff]
        %v349 = vld [vmem:[%s320 + $0x10] sm:$0xff]
        %v350 = vld [vmem:[%s320 + $0x18] sm:$0xff]
        %v351 = vld [vmem:[%s320 + $0x20] sm:$0xff]
        %v352 = vld [vmem:[%s320 + $0x28] sm:$0xff]
        %v353 = vld [vmem:[%s320 + $0x30] sm:$0xff]
        %v354 = vld [vmem:[%s320 + $0x38] sm:$0xff]
        %v355 = vld [vmem:[%s320 + $0x40] sm:$0xff]
        %v356 = vld [vmem:[%s320 + $0x48] sm:$0xff]
        %v357 = vld [vmem:[%s320 + $0x50] sm:$0xff]
        %v358 = vld [vmem:[%s320 + $0x58] sm:$0xff]
        %v359 = vld [vmem:[%s320 + $0x60] sm:$0xff]
        %v360 = vld [vmem:[%s320 + $0x68] sm:$0xff]
        %v361 = vld [vmem:[%s320 + $0x70] sm:$0xff]
        %v362 = vld [vmem:[%s320 + $0x78] sm:$0xff]
        %v363 = vld [vmem:[%s320 + $0x80] sm:$0xff]
        %v364 = vld [vmem:[%s320 + $0x88] sm:$0xff]
        %v365 = vld [vmem:[%s320 + $0x90] sm:$0xff]
        %v366 = vld [vmem:[%s320 + $0x98] sm:$0xff]
        %v367 = vld [vmem:[%s320 + $0xa0] sm:$0xff]
        %v368 = vld [vmem:[%s320 + $0xa8] sm:$0xff]
        %v369 = vld [vmem:[%s320 + $0xb0] sm:$0xff]
        %v370 = vld [vmem:[%s320 + $0xb8] sm:$0xff]
        %v371 = vld [vmem:[%s320 + $0xc0] sm:$0xff]
        %v372 = vld [vmem:[%s320 + $0xc8] sm:$0xff]
        %v373 = vld [vmem:[%s320 + $0xd0] sm:$0xff]
        %v374 = vld [vmem:[%s320 + $0xd8] sm:$0xff]
        %v375 = vld [vmem:[%s320 + $0xe0] sm:$0xff]
        %v376 = vld [vmem:[%s320 + $0xe8] sm:$0xff]
        %v377 = vld [vmem:[%s320 + $0xf0] sm:$0xff]
        %v378 = vld [vmem:[%s320 + $0xf8] sm:$0xff]
        %v379 = vld [vmem:[%s4] sm:$0xff]
        %v380 = vld [vmem:[%s4 + $0x8] sm:$0xff]
        %v381 = vld [vmem:[%s4 + $0x10] sm:$0xff]
        %v382 = vld [vmem:[%s4 + $0x18] sm:$0xff]
        %v383 = vld [vmem:[%s4 + $0x20] sm:$0xff]
        %v384 = vld [vmem:[%s4 + $0x28] sm:$0xff]
        %v385 = vld [vmem:[%s4 + $0x30] sm:$0xff]
        %v386 = vld [vmem:[%s4 + $0x38] sm:$0xff]
        %v387 = vld [vmem:[%s336] sm:$0xff]
        %v388 = vld [vmem:[%s336 + $0x8] sm:$0xff]
        %v389 = vld [vmem:[%s336 + $0x10] sm:$0xff]
        %v390 = vld [vmem:[%s336 + $0x18] sm:$0xff]
        %v391 = vld [vmem:[%s336 + $0x20] sm:$0xff]
        %v392 = vld [vmem:[%s336 + $0x28] sm:$0xff]
        %v393 = vld [vmem:[%s336 + $0x30] sm:$0xff]
        %v394 = vld [vmem:[%s336 + $0x38] sm:$0xff]
        %v395 = vld [vmem:[%s336 + $0x40] sm:$0xff]
        %v396 = vld [vmem:[%s336 + $0x48] sm:$0xff]
        %v397 = vld [vmem:[%s336 + $0x50] sm:$0xff]
        %v398 = vld [vmem:[%s336 + $0x58] sm:$0xff]
        %v399 = vld [vmem:[%s336 + $0x60] sm:$0xff]
        %v400 = vld [vmem:[%s336 + $0x68] sm:$0xff]
        %v401 = vld [vmem:[%s336 + $0x70] sm:$0xff]
        %v402 = vld [vmem:[%s336 + $0x78] sm:$0xff]
        %v403 = vld [vmem:[%s336 + $0x80] sm:$0xff]
        %v404 = vld [vmem:[%s336 + $0x88] sm:$0xff]
        %v405 = vld [vmem:[%s336 + $0x90] sm:$0xff]
        %v406 = vld [vmem:[%s336 + $0x98] sm:$0xff]
        %v407 = vld [vmem:[%s336 + $0xa0] sm:$0xff]
        %v408 = vld [vmem:[%s336 + $0xa8] sm:$0xff]
        %v409 = vld [vmem:[%s336 + $0xb0] sm:$0xff]
        %v410 = vld [vmem:[%s336 + $0xb8] sm:$0xff]
        %v411 = vld [vmem:[%s336 + $0xc0] sm:$0xff]
        %v412 = vld [vmem:[%s336 + $0xc8] sm:$0xff]
        %v413 = vld [vmem:[%s336 + $0xd0] sm:$0xff]
        %v414 = vld [vmem:[%s336 + $0xd8] sm:$0xff]
        %v415 = vld [vmem:[%s336 + $0xe0] sm:$0xff]
        %v416 = vld [vmem:[%s336 + $0xe8] sm:$0xff]
        %v417 = vld [vmem:[%s336 + $0xf0] sm:$0xff]
        %v418 = vld [vmem:[%s336 + $0xf8] sm:$0xff]
        %vm419 = vcmask 31744
        %v421 = vsel %vm419, %v379, 0
        %v424 = vsel %vm419, %v380, 0
        %v427 = vsel %vm419, %v381, 0
        %v430 = vsel %vm419, %v382, 0
        %v433 = vsel %vm419, %v383, 0
        %v436 = vsel %vm419, %v384, 0
        %v439 = vsel %vm419, %v385, 0
        %v442 = vsel %vm419, %v386, 0
        %v445 = vsel %vm419, %v387, 0
        %v448 = vsel %vm419, %v388, 0
        %v451 = vsel %vm419, %v389, 0
        %v454 = vsel %vm419, %v390, 0
        %v457 = vsel %vm419, %v391, 0
        %v460 = vsel %vm419, %v392, 0
        %v463 = vsel %vm419, %v393, 0
        %v466 = vsel %vm419, %v394, 0
        %v469 = vsel %vm419, %v395, 0
        %v472 = vsel %vm419, %v396, 0
        %v475 = vsel %vm419, %v397, 0
        %v478 = vsel %vm419, %v398, 0
        %v481 = vsel %vm419, %v399, 0
        %v484 = vsel %vm419, %v400, 0
        %v487 = vsel %vm419, %v401, 0
        %v490 = vsel %vm419, %v402, 0
        %v493 = vsel %vm419, %v403, 0
        %v496 = vsel %vm419, %v404, 0
        %v499 = vsel %vm419, %v405, 0
        %v502 = vsel %vm419, %v406, 0
        %v505 = vsel %vm419, %v407, 0
        %v508 = vsel %vm419, %v408, 0
        %v511 = vsel %vm419, %v409, 0
        %v514 = vsel %vm419, %v410, 0
        %v517 = vsel %vm419, %v411, 0
        %v520 = vsel %vm419, %v412, 0
        %v523 = vsel %vm419, %v413, 0
        %v526 = vsel %vm419, %v414, 0
        %v529 = vsel %vm419, %v415, 0
        %v532 = vsel %vm419, %v416, 0
        %v535 = vsel %vm419, %v417, 0
        %v538 = vsel %vm419, %v418, 0
        %540 = vmatprep.subr.mxu0 0.0
        %541 = vmatpush1.xpose.msra.mxu0 %v445
        %542 = vmatprep.subr.mxu0 0.0
        %543 = vmatpush1.xpose.msra.mxu0 %v448
        %544 = vmatprep.subr.mxu0 0.0
        %545 = vmatpush1.xpose.msra.mxu0 %v451
        %546 = vmatprep.subr.mxu0 0.0
        %547 = vmatpush1.xpose.msra.mxu0 %v454
        %548 = vmatprep.subr.mxu0 0.0
        %549 = vmatpush1.xpose.msra.mxu0 %v457
        %550 = vmatprep.subr.mxu0 0.0
        %551 = vmatpush1.xpose.msra.mxu0 %v460
        %552 = vmatprep.subr.mxu0 0.0
        %553 = vmatpush1.xpose.msra.mxu0 %v463
        %554 = vmatprep.subr.mxu0 0.0
        %555 = vmatpush1.xpose.msra.mxu0 %v466
        %556 = vmatprep.subr.mxu0 0.0
        %557 = vmatpush1.xpose.msra.mxu0 %v469
        %558 = vmatprep.subr.mxu0 0.0
        %559 = vmatpush1.xpose.msra.mxu0 %v472
        %560 = vmatprep.subr.mxu0 0.0
        %561 = vmatpush1.xpose.msra.mxu0 %v475
        %562 = vmatprep.subr.mxu0 0.0
        %563 = vmatpush1.xpose.msra.mxu0 %v478
        %564 = vmatprep.subr.mxu0 0.0
        %565 = vmatpush1.xpose.msra.mxu0 %v481
        %566 = vmatprep.subr.mxu0 0.0
        %567 = vmatpush1.xpose.msra.mxu0 %v484
        %568 = vmatprep.subr.mxu0 0.0
        %569 = vmatpush1.xpose.msra.mxu0 %v487
        %570 = vmatprep.subr.mxu0 0.0
        %571 = vmatpush1.xpose.msra.mxu0 %v490
        %572 = vmatprep.subr.mxu0 0.0
        %573 = vmatpush1.xpose.msra.mxu0 %v493
        %574 = vmatprep.subr.mxu0 0.0
        %575 = vmatpush1.xpose.msra.mxu0 %v496
        %576 = vmatprep.subr.mxu0 0.0
        %577 = vmatpush1.xpose.msra.mxu0 %v499
        %578 = vmatprep.subr.mxu0 0.0
        %579 = vmatpush1.xpose.msra.mxu0 %v502
        %580 = vmatprep.subr.mxu0 0.0
        %581 = vmatpush1.xpose.msra.mxu0 %v505
        %582 = vmatprep.subr.mxu0 0.0
        %583 = vmatpush1.xpose.msra.mxu0 %v508
        %584 = vmatprep.subr.mxu0 0.0
        %585 = vmatpush1.xpose.msra.mxu0 %v511
        %586 = vmatprep.subr.mxu0 0.0
        %587 = vmatpush1.xpose.msra.mxu0 %v514
        %588 = vmatprep.subr.mxu0 0.0
        %589 = vmatpush1.xpose.msra.mxu0 %v517
        %590 = vmatprep.subr.mxu0 0.0
        %591 = vmatpush1.xpose.msra.mxu0 %v520
        %592 = vmatprep.subr.mxu0 0.0
        %593 = vmatpush1.xpose.msra.mxu0 %v523
        %594 = vmatprep.subr.mxu0 0.0
        %595 = vmatpush1.xpose.msra.mxu0 %v526
        %596 = vmatprep.subr.mxu0 0.0
        %597 = vmatpush1.xpose.msra.mxu0 %v529
        %598 = vmatprep.subr.mxu0 0.0
        %599 = vmatpush1.xpose.msra.mxu0 %v532
        %600 = vmatprep.subr.mxu0 0.0
        %601 = vmatpush1.xpose.msra.mxu0 %v535
        %602 = vmatprep.subr.mxu0 0.0
        %603 = vmatpush1.xpose.msra.mxu0 %v538
        %604 = vmatprep.mubr.f32.mxu0 0.0
        %605 = vmatmul.mubr.f32.gmra.mrb[0].mxu0 %v421
        %v606 = vpop.f32.mrb[0].mxu0
        %v607 = vadd.f32 0.0, %v606
        %v608 = vpop.f32.mrb[0].mxu0
        %v609 = vadd.f32 0.0, %v608
        %610 = vmatprep.mubr.f32.mxu0 0.0
        %611 = vmatmul.mubr.f32.gmra.mrb[0].mxu0 %v424
        %v612 = vpop.f32.mrb[0].mxu0
        %v613 = vadd.f32 0.0, %v612
        %v614 = vpop.f32.mrb[0].mxu0
        %v615 = vadd.f32 0.0, %v614
        %616 = vmatprep.mubr.f32.mxu0 0.0
        %617 = vmatmul.mubr.f32.gmra.mrb[0].mxu0 %v427
        %v618 = vpop.f32.mrb[0].mxu0
        %v619 = vadd.f32 0.0, %v618
        %v620 = vpop.f32.mrb[0].mxu0
        %v621 = vadd.f32 0.0, %v620
        %622 = vmatprep.mubr.f32.mxu0 0.0
        %623 = vmatmul.mubr.f32.gmra.mrb[0].mxu0 %v430
        %v624 = vpop.f32.mrb[0].mxu0
        %v625 = vadd.f32 0.0, %v624
        %v626 = vpop.f32.mrb[0].mxu0
        %v627 = vadd.f32 0.0, %v626
        %628 = vmatprep.mubr.f32.mxu0 0.0
        %629 = vmatmul.mubr.f32.gmra.mrb[0].mxu0 %v433
        %v630 = vpop.f32.mrb[0].mxu0
        %v631 = vadd.f32 0.0, %v630
        %v632 = vpop.f32.mrb[0].mxu0
        %v633 = vadd.f32 0.0, %v632
        %634 = vmatprep.mubr.f32.mxu0 0.0
        %635 = vmatmul.mubr.f32.gmra.mrb[0].mxu0 %v436
        %v636 = vpop.f32.mrb[0].mxu0
        %v637 = vadd.f32 0.0, %v636
        %v638 = vpop.f32.mrb[0].mxu0
        %v639 = vadd.f32 0.0, %v638
        %640 = vmatprep.mubr.f32.mxu0 0.0
        %641 = vmatmul.mubr.f32.gmra.mrb[0].mxu0 %v439
        %v642 = vpop.f32.mrb[0].mxu0
        %v643 = vadd.f32 0.0, %v642
        %v644 = vpop.f32.mrb[0].mxu0
        %v645 = vadd.f32 0.0, %v644
        %646 = vmatprep.mubr.f32.mxu0 0.0
        %647 = vmatmul.mubr.f32.gmra.mrb[0].mxu0 %v442
        %v648 = vpop.f32.mrb[0].mxu0
        %v649 = vadd.f32 0.0, %v648
        %v650 = vpop.f32.mrb[0].mxu0
        %v651 = vadd.f32 0.0, %v650
        %652 = vdwg.mxu0
        %vm653 = vcmask 261120
        %v655 = vsel %vm653, %v339, 0
        %v658 = vsel %vm653, %v340, 0
        %v661 = vsel %vm653, %v341, 0
        %v664 = vsel %vm653, %v342, 0
        %v667 = vsel %vm653, %v343, 0
        %v670 = vsel %vm653, %v344, 0
        %v673 = vsel %vm653, %v345, 0
        %v676 = vsel %vm653, %v346, 0
        %v679 = vsel %vm653, %v347, 0
        %v682 = vsel %vm653, %v348, 0
        %v685 = vsel %vm653, %v349, 0
        %v688 = vsel %vm653, %v350, 0
        %v691 = vsel %vm653, %v351, 0
        %v694 = vsel %vm653, %v352, 0
        %v697 = vsel %vm653, %v353, 0
        %v700 = vsel %vm653, %v354, 0
        %v703 = vsel %vm653, %v355, 0
        %v706 = vsel %vm653, %v356, 0
        %v709 = vsel %vm653, %v357, 0
        %v712 = vsel %vm653, %v358, 0
        %v715 = vsel %vm653, %v359, 0
        %v718 = vsel %vm653, %v360, 0
        %v721 = vsel %vm653, %v361, 0
        %v724 = vsel %vm653, %v362, 0
        %v727 = vsel %vm653, %v363, 0
        %v730 = vsel %vm653, %v364, 0
        %v733 = vsel %vm653, %v365, 0
        %v736 = vsel %vm653, %v366, 0
        %v739 = vsel %vm653, %v367, 0
        %v742 = vsel %vm653, %v368, 0
        %v745 = vsel %vm653, %v369, 0
        %v748 = vsel %vm653, %v370, 0
        %v751 = vsel %vm653, %v371, 0
        %v754 = vsel %vm653, %v372, 0
        %v757 = vsel %vm653, %v373, 0
        %v760 = vsel %vm653, %v374, 0
        %v763 = vsel %vm653, %v375, 0
        %v766 = vsel %vm653, %v376, 0
        %v769 = vsel %vm653, %v377, 0
        %v772 = vsel %vm653, %v378, 0
        %774 = vmatprep.subr.mxu0 0.0
        %775 = vmatpush1.xpose.msra.mxu0 %v679
        %776 = vmatprep.subr.mxu0 0.0
        %777 = vmatpush1.xpose.msra.mxu0 %v682
        %778 = vmatprep.subr.mxu0 0.0
        %779 = vmatpush1.xpose.msra.mxu0 %v685
        %780 = vmatprep.subr.mxu0 0.0
        %781 = vmatpush1.xpose.msra.mxu0 %v688
        %782 = vmatprep.subr.mxu0 0.0
        %783 = vmatpush1.xpose.msra.mxu0 %v691
        %784 = vmatprep.subr.mxu0 0.0
        %785 = vmatpush1.xpose.msra.mxu0 %v694
        %786 = vmatprep.subr.mxu0 0.0
        %787 = vmatpush1.xpose.msra.mxu0 %v697
        %788 = vmatprep.subr.mxu0 0.0
        %789 = vmatpush1.xpose.msra.mxu0 %v700
        %790 = vmatprep.subr.mxu0 0.0
        %791 = vmatpush1.xpose.msra.mxu0 %v703
        %792 = vmatprep.subr.mxu0 0.0
        %793 = vmatpush1.xpose.msra.mxu0 %v706
        %794 = vmatprep.subr.mxu0 0.0
        %795 = vmatpush1.xpose.msra.mxu0 %v709
        %796 = vmatprep.subr.mxu0 0.0
        %797 = vmatpush1.xpose.msra.mxu0 %v712
        %798 = vmatprep.subr.mxu0 0.0
        %799 = vmatpush1.xpose.msra.mxu0 %v715
        %800 = vmatprep.subr.mxu0 0.0
        %801 = vmatpush1.xpose.msra.mxu0 %v718
        %802 = vmatprep.subr.mxu0 0.0
        %803 = vmatpush1.xpose.msra.mxu0 %v721
        %804 = vmatprep.subr.mxu0 0.0
        %805 = vmatpush1.xpose.msra.mxu0 %v724
        %806 = vmatprep.subr.mxu0 0.0
        %807 = vmatpush1.xpose.msra.mxu0 %v727
        %808 = vmatprep.subr.mxu0 0.0
        %809 = vmatpush1.xpose.msra.mxu0 %v730
        %810 = vmatprep.subr.mxu0 0.0
        %811 = vmatpush1.xpose.msra.mxu0 %v733
        %812 = vmatprep.subr.mxu0 0.0
        %813 = vmatpush1.xpose.msra.mxu0 %v736
        %814 = vmatprep.subr.mxu0 0.0
        %815 = vmatpush1.xpose.msra.mxu0 %v739
        %816 = vmatprep.subr.mxu0 0.0
        %817 = vmatpush1.xpose.msra.mxu0 %v742
        %818 = vmatprep.subr.mxu0 0.0
        %819 = vmatpush1.xpose.msra.mxu0 %v745
        %820 = vmatprep.subr.mxu0 0.0
        %821 = vmatpush1.xpose.msra.mxu0 %v748
        %822 = vmatprep.subr.mxu0 0.0
        %823 = vmatpush1.xpose.msra.mxu0 %v751
        %824 = vmatprep.subr.mxu0 0.0
        %825 = vmatpush1.xpose.msra.mxu0 %v754
        %826 = vmatprep.subr.mxu0 0.0
        %827 = vmatpush1.xpose.msra.mxu0 %v757
        %828 = vmatprep.subr.mxu0 0.0
        %829 = vmatpush1.xpose.msra.mxu0 %v760
        %830 = vmatprep.subr.mxu0 0.0
        %831 = vmatpush1.xpose.msra.mxu0 %v763
        %832 = vmatprep.subr.mxu0 0.0
        %833 = vmatpush1.xpose.msra.mxu0 %v766
        %834 = vmatprep.subr.mxu0 0.0
        %835 = vmatpush1.xpose.msra.mxu0 %v769
        %836 = vmatprep.subr.mxu0 0.0
        %837 = vmatpush1.xpose.msra.mxu0 %v772
        %838 = vmatprep.mubr.f32.mxu0 0.0
        %839 = vmatmul.mubr.f32.gmra.mrb[0].mxu0 %v655
        %v840 = vpop.f32.mrb[0].mxu0
        %v841 = vadd.f32 %v607, %v840
        %v842 = vpop.f32.mrb[0].mxu0
        %v843 = vadd.f32 %v609, %v842
        %844 = vmatprep.mubr.f32.mxu0 0.0
        %845 = vmatmul.mubr.f32.gmra.mrb[0].mxu0 %v658
        %v846 = vpop.f32.mrb[0].mxu0
        %v847 = vadd.f32 %v613, %v846
        %v848 = vpop.f32.mrb[0].mxu0
        %v849 = vadd.f32 %v615, %v848
        %850 = vmatprep.mubr.f32.mxu0 0.0
        %851 = vmatmul.mubr.f32.gmra.mrb[0].mxu0 %v661
        %v852 = vpop.f32.mrb[0].mxu0
        %v853 = vadd.f32 %v619, %v852
        %v854 = vpop.f32.mrb[0].mxu0
        %v855 = vadd.f32 %v621, %v854
        %856 = vmatprep.mubr.f32.mxu0 0.0
        %857 = vmatmul.mubr.f32.gmra.mrb[0].mxu0 %v664
        %v858 = vpop.f32.mrb[0].mxu0
        %v859 = vadd.f32 %v625, %v858
        %v860 = vpop.f32.mrb[0].mxu0
        %v861 = vadd.f32 %v627, %v860
        %862 = vmatprep.mubr.f32.mxu0 0.0
        %863 = vmatmul.mubr.f32.gmra.mrb[0].mxu0 %v667
        %v864 = vpop.f32.mrb[0].mxu0
        %v865 = vadd.f32 %v631, %v864
        %v866 = vpop.f32.mrb[0].mxu0
        %v867 = vadd.f32 %v633, %v866
        %868 = vmatprep.mubr.f32.mxu0 0.0
        %869 = vmatmul.mubr.f32.gmra.mrb[0].mxu0 %v670
        %v870 = vpop.f32.mrb[0].mxu0
        %v871 = vadd.f32 %v637, %v870
        %v872 = vpop.f32.mrb[0].mxu0
        %v873 = vadd.f32 %v639, %v872
        %874 = vmatprep.mubr.f32.mxu0 0.0
        %875 = vmatmul.mubr.f32.gmra.mrb[0].mxu0 %v673
        %v876 = vpop.f32.mrb[0].mxu0
        %v877 = vadd.f32 %v643, %v876
        %v878 = vpop.f32.mrb[0].mxu0
        %v879 = vadd.f32 %v645, %v878
        %880 = vmatprep.mubr.f32.mxu0 0.0
        %881 = vmatmul.mubr.f32.gmra.mrb[0].mxu0 %v676
        %v882 = vpop.f32.mrb[0].mxu0
        %v883 = vadd.f32 %v649, %v882
        %v884 = vpop.f32.mrb[0].mxu0
        %v885 = vadd.f32 %v651, %v884
        %886 = vdwg.mxu0
        %v887 = vld [vmem:[%s330] sm:$0xf]
        %v888 = vmul.f32 %v887, 0.0014285714
        %v889 = vadd.f32 %v888, 1.0
        %v890 = vlog2.pop %v889
        %v891 = vmul.f32 %v890, 0.6931472
        %v892 = vld [vmem:[%s5] sm:$0xff]
        %v893 = vld [vmem:[%s5 + $0x8] sm:$0xff]
        %v894 = vld [vmem:[%s5 + $0x10] sm:$0xff]
        %v895 = vld [vmem:[%s5 + $0x18] sm:$0xff]
        %v896 = vld [vmem:[%s5 + $0x20] sm:$0xff]
        %v897 = vld [vmem:[%s5 + $0x28] sm:$0xff]
        %v898 = vld [vmem:[%s5 + $0x30] sm:$0xff]
        %v899 = vld [vmem:[%s5 + $0x38] sm:$0xff]
        %901 = vset.pattern.permute.xlu0 0
        %902 = vperm.xlu0 %901, %v892
        %v903 = vpop.permute.xlu0 %902
        %906 = vset.pattern.permute.xlu0 0
        %907 = vperm.xlu0 %906, %v893
        %v908 = vpop.permute.xlu0 %907
        %911 = vset.pattern.permute.xlu0 0
        %912 = vperm.xlu0 %911, %v894
        %v913 = vpop.permute.xlu0 %912
        %916 = vset.pattern.permute.xlu0 0
        %917 = vperm.xlu0 %916, %v895
        %v918 = vpop.permute.xlu0 %917
        %921 = vset.pattern.permute.xlu0 0
        %922 = vperm.xlu0 %921, %v896
        %v923 = vpop.permute.xlu0 %922
        %926 = vset.pattern.permute.xlu0 0
        %927 = vperm.xlu0 %926, %v897
        %v928 = vpop.permute.xlu0 %927
        %931 = vset.pattern.permute.xlu0 0
        %932 = vperm.xlu0 %931, %v898
        %v933 = vpop.permute.xlu0 %932
        %936 = vset.pattern.permute.xlu0 0
        %937 = vperm.xlu0 %936, %v899
        %v938 = vpop.permute.xlu0 %937
        %v941 = vlaneseq
        %v942 = vshrl.u32 %v941, 7
        %v943 = vsub.s32 0, %v942
        %v944 = vrot.slane %v891, %v943
        %v945 = vlaneseq
        %v946 = vshrl.u32 %v945, 7
        %v947 = vsub.s32 2, %v946
        %v948 = vrot.slane %v891, %v947
        %v951 = vlaneseq
        %v952 = vshrl.u32 %v951, 7
        %v953 = vsub.s32 0, %v952
        %v954 = vrot.slane %v944, %v953
        %v955 = vlaneseq
        %v956 = vshrl.u32 %v955, 7
        %v957 = vsub.s32 0, %v956
        %v958 = vrot.slane %v948, %v957
        %v959 = vmul.f32 %v903, %v954
        %v960 = vmul.f32 %v903, %v958
        %v961 = vmul.f32 %v908, %v954
        %v962 = vmul.f32 %v908, %v958
        %v963 = vmul.f32 %v913, %v954
        %v964 = vmul.f32 %v913, %v958
        %v965 = vmul.f32 %v918, %v954
        %v966 = vmul.f32 %v918, %v958
        %v967 = vmul.f32 %v923, %v954
        %v968 = vmul.f32 %v923, %v958
        %v969 = vmul.f32 %v928, %v954
        %v970 = vmul.f32 %v928, %v958
        %v971 = vmul.f32 %v933, %v954
        %v972 = vmul.f32 %v933, %v958
        %v973 = vmul.f32 %v938, %v954
        %v974 = vmul.f32 %v938, %v958
        %v975 = vadd.f32 %v841, %v959
        %v976 = vadd.f32 %v843, %v960
        %v977 = vadd.f32 %v847, %v961
        %v978 = vadd.f32 %v849, %v962
        %v979 = vadd.f32 %v853, %v963
        %v980 = vadd.f32 %v855, %v964
        %v981 = vadd.f32 %v859, %v965
        %v982 = vadd.f32 %v861, %v966
        %v983 = vadd.f32 %v865, %v967
        %v984 = vadd.f32 %v867, %v968
        %v985 = vadd.f32 %v871, %v969
        %v986 = vadd.f32 %v873, %v970
        %v987 = vadd.f32 %v877, %v971
        %v988 = vadd.f32 %v879, %v972
        %v989 = vadd.f32 %v883, %v973
        %v990 = vadd.f32 %v885, %v974
        %991 = vset.pattern.permute.xlu0 1
        %992 = vperm.xlu0 %991, %v892
        %v993 = vpop.permute.xlu0 %992
        %995 = vset.pattern.permute.xlu0 1
        %996 = vperm.xlu0 %995, %v893
        %v997 = vpop.permute.xlu0 %996
        %999 = vset.pattern.permute.xlu0 1
        %1000 = vperm.xlu0 %999, %v894
        %v1001 = vpop.permute.xlu0 %1000
        %1003 = vset.pattern.permute.xlu0 1
        %1004 = vperm.xlu0 %1003, %v895
        %v1005 = vpop.permute.xlu0 %1004
        %1007 = vset.pattern.permute.xlu0 1
        %1008 = vperm.xlu0 %1007, %v896
        %v1009 = vpop.permute.xlu0 %1008
        %1011 = vset.pattern.permute.xlu0 1
        %1012 = vperm.xlu0 %1011, %v897
        %v1013 = vpop.permute.xlu0 %1012
        %1015 = vset.pattern.permute.xlu0 1
        %1016 = vperm.xlu0 %1015, %v898
        %v1017 = vpop.permute.xlu0 %1016
        %1019 = vset.pattern.permute.xlu0 1
        %1020 = vperm.xlu0 %1019, %v899
        %v1021 = vpop.permute.xlu0 %1020
        %v1024 = vlaneseq
        %v1025 = vshrl.u32 %v1024, 7
        %v1026 = vsub.s32 1, %v1025
        %v1027 = vrot.slane %v887, %v1026
        %v1028 = vlaneseq
        %v1029 = vshrl.u32 %v1028, 7
        %v1030 = vsub.s32 3, %v1029
        %v1031 = vrot.slane %v887, %v1030
        %v1034 = vlaneseq
        %v1035 = vshrl.u32 %v1034, 7
        %v1036 = vsub.s32 1, %v1035
        %v1037 = vrot.slane %v1027, %v1036
        %v1038 = vlaneseq
        %v1039 = vshrl.u32 %v1038, 7
        %v1040 = vsub.s32 1, %v1039
        %v1041 = vrot.slane %v1031, %v1040
        %v1042 = vmul.f32 %v993, %v1037
        %v1043 = vmul.f32 %v993, %v1041
        %v1044 = vmul.f32 %v997, %v1037
        %v1045 = vmul.f32 %v997, %v1041
        %v1046 = vmul.f32 %v1001, %v1037
        %v1047 = vmul.f32 %v1001, %v1041
        %v1048 = vmul.f32 %v1005, %v1037
        %v1049 = vmul.f32 %v1005, %v1041
        %v1050 = vmul.f32 %v1009, %v1037
        %v1051 = vmul.f32 %v1009, %v1041
        %v1052 = vmul.f32 %v1013, %v1037
        %v1053 = vmul.f32 %v1013, %v1041
        %v1054 = vmul.f32 %v1017, %v1037
        %v1055 = vmul.f32 %v1017, %v1041
        %v1056 = vmul.f32 %v1021, %v1037
        %v1057 = vmul.f32 %v1021, %v1041
        %v1058 = vadd.f32 %v975, %v1042
        %v1059 = vadd.f32 %v976, %v1043
        %v1060 = vadd.f32 %v977, %v1044
        %v1061 = vadd.f32 %v978, %v1045
        %v1062 = vadd.f32 %v979, %v1046
        %v1063 = vadd.f32 %v980, %v1047
        %v1064 = vadd.f32 %v981, %v1048
        %v1065 = vadd.f32 %v982, %v1049
        %v1066 = vadd.f32 %v983, %v1050
        %v1067 = vadd.f32 %v984, %v1051
        %v1068 = vadd.f32 %v985, %v1052
        %v1069 = vadd.f32 %v986, %v1053
        %v1070 = vadd.f32 %v987, %v1054
        %v1071 = vadd.f32 %v988, %v1055
        %v1072 = vadd.f32 %v989, %v1056
        %v1073 = vadd.f32 %v990, %v1057
        %1074 = vset.pattern.permute.xlu0 2
        %1075 = vperm.xlu0 %1074, %v892
        %v1076 = vpop.permute.xlu0 %1075
        %1078 = vset.pattern.permute.xlu0 2
        %1079 = vperm.xlu0 %1078, %v893
        %v1080 = vpop.permute.xlu0 %1079
        %1082 = vset.pattern.permute.xlu0 2
        %1083 = vperm.xlu0 %1082, %v894
        %v1084 = vpop.permute.xlu0 %1083
        %1086 = vset.pattern.permute.xlu0 2
        %1087 = vperm.xlu0 %1086, %v895
        %v1088 = vpop.permute.xlu0 %1087
        %1090 = vset.pattern.permute.xlu0 2
        %1091 = vperm.xlu0 %1090, %v896
        %v1092 = vpop.permute.xlu0 %1091
        %1094 = vset.pattern.permute.xlu0 2
        %1095 = vperm.xlu0 %1094, %v897
        %v1096 = vpop.permute.xlu0 %1095
        %1098 = vset.pattern.permute.xlu0 2
        %1099 = vperm.xlu0 %1098, %v898
        %v1100 = vpop.permute.xlu0 %1099
        %1102 = vset.pattern.permute.xlu0 2
        %1103 = vperm.xlu0 %1102, %v899
        %v1104 = vpop.permute.xlu0 %1103
        %v1106 = vadd.f32 %v1058, %v1076
        %v1107 = vadd.f32 %v1059, %v1076
        %v1108 = vadd.f32 %v1060, %v1080
        %v1109 = vadd.f32 %v1061, %v1080
        %v1110 = vadd.f32 %v1062, %v1084
        %v1111 = vadd.f32 %v1063, %v1084
        %v1112 = vadd.f32 %v1064, %v1088
        %v1113 = vadd.f32 %v1065, %v1088
        %v1114 = vadd.f32 %v1066, %v1092
        %v1115 = vadd.f32 %v1067, %v1092
        %v1116 = vadd.f32 %v1068, %v1096
        %v1117 = vadd.f32 %v1069, %v1096
        %v1118 = vadd.f32 %v1070, %v1100
        %v1119 = vadd.f32 %v1071, %v1100
        %v1120 = vadd.f32 %v1072, %v1104
        %v1121 = vadd.f32 %v1073, %v1104
        %1122 = vst [vmem:[%s311] sm:$0xff] %v1106
        %1123 = vst [vmem:[%s311 + $0x8] sm:$0xff] %v1107
        %1124 = vst [vmem:[%s311 + $0x10] sm:$0xff] %v1108
        %1125 = vst [vmem:[%s311 + $0x18] sm:$0xff] %v1109
        %1126 = vst [vmem:[%s311 + $0x20] sm:$0xff] %v1110
        %1127 = vst [vmem:[%s311 + $0x28] sm:$0xff] %v1111
        %1128 = vst [vmem:[%s311 + $0x30] sm:$0xff] %v1112
        %1129 = vst [vmem:[%s311 + $0x38] sm:$0xff] %v1113
        %1130 = vst [vmem:[%s311 + $0x40] sm:$0xff] %v1114
        %1131 = vst [vmem:[%s311 + $0x48] sm:$0xff] %v1115
        %1132 = vst [vmem:[%s311 + $0x50] sm:$0xff] %v1116
        %1133 = vst [vmem:[%s311 + $0x58] sm:$0xff] %v1117
        %1134 = vst [vmem:[%s311 + $0x60] sm:$0xff] %v1118
        %1135 = vst [vmem:[%s311 + $0x68] sm:$0xff] %v1119
        %1136 = vst [vmem:[%s311 + $0x70] sm:$0xff] %v1120
        %1137 = vst [vmem:[%s311 + $0x78] sm:$0xff] %v1121
        %s1138 = sand.u32 %s187, 1
        %s1139 = scalar_lea.sflag [#allocation3], %s1138
        %s1140 = sand.u32 %s187, 1
        %s1141 = smul.addr %s1140, 128
        %s1142 = scalar_lea.vmem [#allocation2], %s1141
        // Predicated region
        $region45: #{tpu_custom_call.1} parent=43 // pred_check
          %p1143 = pneg %p197
        $region46: #{tpu_custom_call.1} parent=43 // pred_check_branch
          %1145 = sbr.rel (%p1143) target = $region48
        $region47: #{tpu_custom_call.1} parent=43 // pred_region
          %s1146 = smul.u32 2, %s24
          %s1148 = ssub.s32 2048, 2048
          %1149 = vsyncadd %s1139, %s1148
          %s1150 = smul.addr %s25, 32
          %s1151 = sadd.s32 %s1146, %s1150
          %s1152 = smul.addr %s1151, 128
          %s1153 = scalar_lea.hbm %s6, %s1152
          %s1154 = sshll.u32 %s1142, 4
          %s1155 = int_to_ptr.vmem [resolvable:$true] %s1154
          %1160 = dma.vmem_to_hbm [thread:$0]  %s1155, 2048, %s1153, %s1139, 256, 512, 16
        $region48: #{tpu_custom_call.1} parent=43 // pred_fallthru
          _
      $region44: #{tpu_custom_call.1} parent=5 // pred_fallthru
        _
      %p1161 = scmp.le.s32.totalorder 2, %s15
      // Predicated region
      $region49: #{tpu_custom_call.1} parent=5 // pred_check
        %p1162 = pneg %p1161
      $region50: #{tpu_custom_call.1} parent=5 // pred_check_branch
        %1164 = sbr.rel (%p1162) target = $region52
      $region51: #{tpu_custom_call.1} parent=5 // pred_region
        %s1165 = ssub.s32 %s15, 2
        // Predicated region
        $region53: #{tpu_custom_call.1} parent=51 // pred_check
          %p1166 = pneg %p203
        $region54: #{tpu_custom_call.1} parent=51 // pred_check_branch
          %1168 = sbr.rel (%p1166) target = $region56
        $region55: #{tpu_custom_call.1} parent=51 // pred_region
          %s1169 = sand.u32 %s188, 1
          %s1170 = scalar_lea.sflag [#allocation3], %s1169
          %s1171 = sand.u32 %s188, 1
          %s1172 = smul.addr %s1171, 128
          %s1173 = scalar_lea.vmem [#allocation2], %s1172
          %1174 = dma.done %s1170, 2048
        $region56: #{tpu_custom_call.1} parent=51 // pred_fallthru
          _
      $region52: #{tpu_custom_call.1} parent=5 // pred_fallthru
        _
    $region6: #{tpu_custom_call.1} parent=1 // loop_footer
      %s19 = sadd.s32 1, %s15
    $region7: #{tpu_custom_call.1} parent=1 // loop_footer_branch
      %14 = sbr.rel target = $region3
    $region8: #{tpu_custom_call.1} parent=1 // loop_exit
      _
    %1175 = vsyncpa [#allocation3], 1
    %s1176 = scalar_lea.sflag [#allocation3], 1
    %1177 = vsyncpa %s1176, 1

</llo_original>
